<compile_context>
chip_gen: v5e
topology: v5e:2x2
jax: 0.10.0
libtpu: 0.0.40
codegen_flags: <defaults>
</compile_context>

<pallas_src>
import itertools

import jax
import jax.numpy as jnp
from jax.experimental import pallas as pl
from jax.experimental.pallas import tpu as pltpu

SUBLANES_F32 = 8  # pad batch to a full f32 sublane tile


# --------------------------------------------------------------------------
# Shared cell math (used by both the per-step and the sequence kernel)
# --------------------------------------------------------------------------
def _lstm_cell_math(x, state, wx, wh, b, hm, cm):
    """One fused LSTMCell update on a lane-packed state.

    x     : (Bp, 3*size) bf16
    state : (Bp, 4H)     f32   -- packed [h | c | 0 | 0]
    wx    : (3*size, 4H) bf16  -- W_ih^T, g-gate columns pre-scaled by 2
    wh    : (4H, 4H)     bf16  -- rows [0,H) = W_hh^T (g columns x2), rest zero
    b     : (1, 4H)      f32   -- b_ih + b_hh, g slice x2
    hm/cm : (1, 4H)      f32   -- 0/1 masks for lanes [0,H) / [H,2H)
    returns (Bp, 4H) f32 packed [h_new | c_new | 0 | 0]
    """
    h4 = state.shape[-1]
    hh = h4 // 4
    # Two MXU passes (K = 3*size and K = 4H), f32 accumulation.
    gates = (jnp.dot(x, wx, preferred_element_type=jnp.float32)
             + jnp.dot(state.astype(jnp.bfloat16), wh,
                       preferred_element_type=jnp.float32)
             + b)
    # Single full-width EUP pass; gate lanes are [ i | f | 2g | o ].
    sig = jax.nn.sigmoid(gates)
    # XLU lane rotations (np.roll convention: roll(x, s)[j] == x[(j - s) % 4H]).
    r1 = pltpu.roll(sig, shift=hh, axis=1)       # [0,H)=sig(o), [H,2H)=sig(i)
    r2 = pltpu.roll(sig, shift=3 * hh, axis=1)   # [H,2H)=sig(2g)
    # c_new valid in lanes [H,2H):  sig(f)*c_prev + sig(i)*tanh(g)
    # with tanh(g) = 2*sigmoid(2g) - 1  (kills the full-width tanh(gates) pass).
    c_new = sig * state + r1 * (2.0 * r2 - 1.0)
    r3 = pltpu.roll(c_new, shift=3 * hh, axis=1)  # lanes [0,H) <- c_new
    h_new = r1 * jnp.tanh(r3)                     # valid in lanes [0,H)
    # Lane-dense repack [h | c | 0 | 0] via resident masks (no per-step iota).
    return hm * h_new + cm * c_new


# --------------------------------------------------------------------------
# Per-step kernel (online parser path)
# --------------------------------------------------------------------------
def _tracker_step_kernel(x_ref, state_ref, wx_ref, wh_ref, b_ref,
                         hm_ref, cm_ref, out_ref):
    out_ref[...] = _lstm_cell_math(
        x_ref[...], state_ref[...], wx_ref[...], wh_ref[...],
        b_ref[...], hm_ref[...], cm_ref[...]).astype(out_ref.dtype)


def _tracker_step_core(x, state, wx, wh, bias, hmask, cmask):
    bp, h4 = state.shape
    b, k = x.shape
    # Pad batch to a full sublane tile and cast to bf16 on the wrapper side.
    x_pad = jnp.zeros((bp, k), jnp.bfloat16).at[:b].set(x.astype(jnp.bfloat16))
    vmem = pl.BlockSpec(memory_space=pltpu.MemorySpace.VMEM)
    return pl.pallas_call(
        _tracker_step_kernel,
        out_shape=jax.ShapeDtypeStruct((bp, h4), jnp.float32),
        in_specs=[vmem] * 7,
        out_specs=vmem,
        input_output_aliases={1: 0},   # packed state carried in place
    )(x_pad, state, wx, wh, bias, hmask, cmask)


@jax.jit
def tracker_step(x, state, wx, wh, bias, hmask, cmask):
    return _tracker_step_core(x, state, wx, wh, bias, hmask, cmask)


@jax.jit
def tracker_step_predict(x, state, wx, wh, bias, hmask, cmask, w_t_t, b_t):
    new_state = _tracker_step_core(x, state, wx, wh, bias, hmask, cmask)
    hh = state.shape[-1] // 4
    b = x.shape[0]
    # Transition head Linear(H, 4): tiny (B,H)x(H,4); kept in XLA so the kernel
    # never does a 4-wide masked store (per review).
    logits = jnp.dot(new_state[:b, :hh], w_t_t) + b_t
    return new_state, logits


# --------------------------------------------------------------------------
# Sequence-fused kernel (teacher-forced / known transition schedule)
# --------------------------------------------------------------------------
def _tracker_seq_kernel(x_ref, state0_ref, wx_ref, wh_ref, b_ref,
                        hm_ref, cm_ref, out_ref, state_sc):
    t = pl.program_id(0)

    @pl.when(t == 0)
    def _():
        state_sc[...] = state0_ref[...]

    new_state = _lstm_cell_math(
        x_ref[0], state_sc[...], wx_ref[...], wh_ref[...],
        b_ref[...], hm_ref[...], cm_ref[...])
    state_sc[...] = new_state
    out_ref[0] = new_state.astype(out_ref.dtype)


@jax.jit
def tracker_sequence(x_seq, state0, wx, wh, bias, hmask, cmask):
    """All T tracker steps in ONE pallas_call (weights stay VMEM-resident)."""
    t_steps, bp, k = x_seq.shape
    h4 = state0.shape[-1]

    def const(shape):
        return pl.BlockSpec(shape, lambda t: (0, 0))

    return pl.pallas_call(
        _tracker_seq_kernel,
        out_shape=jax.ShapeDtypeStruct((t_steps, bp, h4), jnp.float32),
        grid=(t_steps,),
        in_specs=[
            pl.BlockSpec((1, bp, k), lambda t: (t, 0, 0)),  # per-step x tile
            const((bp, h4)),                                # initial state
            const((k, h4)),                                 # W_x   (resident)
            const((h4, h4)),                                # W_h   (resident)
            const((1, h4)),                                 # bias  (resident)
            const((1, h4)),                                 # h mask
            const((1, h4)),                                 # c mask
        ],
        out_specs=pl.BlockSpec((1, bp, h4), lambda t: (t, 0, 0)),
        scratch_shapes=[pltpu.VMEM((bp, h4), jnp.float32)],
        compiler_params=pltpu.CompilerParams(
            dimension_semantics=("arbitrary",)),            # recurrence
    )(x_seq, state0, wx, wh, bias, hmask, cmask)


# --------------------------------------------------------------------------
# bundle / unbundle (glue; mirrors the PyTorch helpers)
# --------------------------------------------------------------------------
def bundle(lstm_iter):
    if lstm_iter is None:
        return None
    lstm_iter = tuple(lstm_iter)
    if lstm_iter[0] is None:
        return None
    cat = jnp.concatenate(lstm_iter, axis=0)      # (B, 2*size)
    return jnp.split(cat, 2, axis=1)              # [(B, size) h, (B, size) c]


def unbundle(state, batch=None):
    """Packed (Bp, 4H) [h|c|0|0] -> list of per-example (1, 2H) rows.

    NOTE: real SPINN consumers should keep the packed (B, 4H) array and slice
    lazily; this mirrors the original torch API for the demo only.
    """
    if state is None:
        return itertools.repeat(None)
    if isinstance(state, (list, tuple)):          # original (h, c) layout
        cat = jnp.concatenate(tuple(state), axis=1)
    else:
        cat = state[:, : state.shape[-1] // 2]    # (Bp, 2H) = [h | c]
    if batch is not None:
        cat = cat[:batch]
    return [cat[i:i + 1] for i in range(cat.shape[0])]


# --------------------------------------------------------------------------
# Tracker module
# --------------------------------------------------------------------------
class Tracker:
    def __init__(self, size, tracker_size, predict, key):
        self.state_size = tracker_size
        self.predict = predict
        hh = tracker_size
        k = jax.random.split(key, 6)
        bound = 1.0 / (tracker_size ** 0.5)

        def u(kk, shape):
            return jax.random.uniform(kk, shape, jnp.float32, -bound, bound)

        # PyTorch nn.LSTMCell parameter shapes: (4H, 3*size), (4H, H), (4H,), (4H,)
        w_ih = u(k[0], (4 * hh, 3 * size))
        w_hh = u(k[1], (4 * hh, hh))
        b_ih = u(k[2], (4 * hh,))
        b_hh = u(k[3], (4 * hh,))

        # g-gate columns pre-scaled by 2 (exact in bf16) so the kernel can use
        # tanh(g) = 2*sigmoid(2g) - 1 from a single sigmoid pass.
        gscale = jnp.ones((4 * hh,), jnp.float32).at[2 * hh:3 * hh].set(2.0)
        self.g_scale = gscale
        self.w_x = (jnp.transpose(w_ih) * gscale[None, :]).astype(jnp.bfloat16)
        wh_rows = (jnp.transpose(w_hh) * gscale[None, :]).astype(jnp.bfloat16)
        # (4H, 4H): only the first H rows (h lanes of the packed state) are
        # non-zero, so `state @ w_h` needs no lane slicing in the kernel.
        self.w_h = jnp.zeros((4 * hh, 4 * hh), jnp.bfloat16).at[:hh].set(wh_rows)
        self.bias = ((b_ih + b_hh) * gscale).reshape(1, 4 * hh).astype(jnp.float32)

        lane = jnp.arange(4 * hh)
        self.h_mask = (lane < hh).astype(jnp.float32).reshape(1, 4 * hh)
        self.c_mask = ((lane >= hh) & (lane < 2 * hh)
                       ).astype(jnp.float32).reshape(1, 4 * hh)

        if predict:
            w_t = u(k[4], (4, hh))              # nn.Linear(H, 4)
            b_t = u(k[5], (4,))
            self.w_t_t = jnp.transpose(w_t)     # (H, 4)
            self.b_t = b_t.reshape(1, 4)

        self.state = None                        # packed (Bp, 4H) = [h|c|0|0]
        self._batch = None

    def reset_state(self):
        self.state = None
        self._batch = None

    def forward(self, bufs, stacks):
        buf = bundle([b[-1] for b in bufs])[0]
        stack1 = bundle([s[-1] for s in stacks])[0]
        stack2 = bundle([s[-2] for s in stacks])[0]
        x = jnp.concatenate((buf, stack1, stack2), axis=1)   # (B, 3*size)
        b = x.shape[0]
        if self.state is None:
            bp = max(SUBLANES_F32, -(-b // SUBLANES_F32) * SUBLANES_F32)
            self.state = jnp.zeros((bp, 4 * self.state_size), jnp.float32)
            self._batch = b
        if self.predict:
            self.state, logits = tracker_step_predict(
                x, self.state, self.w_x, self.w_h, self.bias,
                self.h_mask, self.c_mask, self.w_t_t, self.b_t)
            return unbundle(self.state, self._batch), logits
        self.state = tracker_step(
            x, self.state, self.w_x, self.w_h, self.bias,
            self.h_mask, self.c_mask)
        return unbundle(self.state, self._batch), None


# --------------------------------------------------------------------------
if __name__ == "__main__":
    key = jax.random.PRNGKey(0)
    size, tracker_size, batch = 32, 32, 2
    H = tracker_size
    pkey, dkey = jax.random.split(key)

    tracker = Tracker(size, tracker_size, predict=True, key=pkey)
    tracker.reset_state()

    bkey, skey = jax.random.split(dkey)
    # Each buffer / stack element is a (1, 2*size) "bundled" (h|c) row,
    # matching the SPINN per-example thin-stack representation.
    bufs = [[jax.random.normal(jax.random.fold_in(bkey, b * 10 + t),
                               (1, 2 * size), jnp.float32)
             for t in range(3)] for b in range(batch)]
    stacks = [[jax.random.normal(jax.random.fold_in(skey, b * 10 + t),
                                 (1, 2 * size), jnp.float32)
               for t in range(3)] for b in range(batch)]

    # Two tracker transitions through the per-step (online-parser) path.
    states, logits = tracker.forward(bufs, stacks)
    states, logits = tracker.forward(bufs, stacks)
    jax.block_until_ready(logits)
    jax.block_until_ready(tracker.state)

    assert len(states) == batch
    assert states[0].shape == (1, 2 * tracker_size)
    assert logits.shape == (batch, 4)

    # predict=False variant: no transition head, no discarded logits work.
    tracker_np = Tracker(size, tracker_size, predict=False, key=pkey)
    tracker_np.reset_state()
    states_np, logits_np = tracker_np.forward(bufs, stacks)
    jax.block_until_ready(tracker_np.state)
    assert logits_np is None and len(states_np) == batch

    # ---- sequence-fused kernel (teacher-forced schedule, ONE pallas_call) --
    buf = bundle([b[-1] for b in bufs])[0]
    s1 = bundle([s[-1] for s in stacks])[0]
    s2 = bundle([s[-2] for s in stacks])[0]
    x = jnp.concatenate((buf, s1, s2), axis=1)                 # (B, 3*size)
    bp = tracker.state.shape[0]
    x_pad = jnp.zeros((bp, 3 * size), jnp.bfloat16).at[:batch].set(
        x.astype(jnp.bfloat16))
    x_seq = jnp.stack([x_pad, x_pad])                          # T = 2 steps
    state0 = jnp.zeros((bp, 4 * H), jnp.float32)
    seq_states = tracker_sequence(x_seq, state0, tracker.w_x, tracker.w_h,
                                  tracker.bias, tracker.h_mask, tracker.c_mask)
    jax.block_until_ready(seq_states)
    assert seq_states.shape == (2, bp, 4 * H)
    # The fused-sequence final state must match the per-step path.
    assert jnp.allclose(seq_states[-1], tracker.state, atol=1e-5, rtol=1e-5), \
        "sequence kernel disagrees with per-step kernel"

    # ---- pure-JAX reference (same bf16-rounded weights, f32 math) ----------
    inv = 1.0 / tracker.g_scale
    wx_f = tracker.w_x.astype(jnp.float32) * inv[None, :]      # bf16(W_ih^T)
    wh_f = tracker.w_h[:H].astype(jnp.float32) * inv[None, :]  # bf16(W_hh^T)
    b_f = tracker.bias * inv[None, :]
    h_ref = jnp.zeros((batch, H), jnp.float32)
    c_ref = jnp.zeros((batch, H), jnp.float32)
    for _ in range(2):
        gates = x @ wx_f + h_ref @ wh_f + b_f
        i_g, f_g, g_g, o_g = jnp.split(gates, 4, axis=1)
        c_ref = jax.nn.sigmoid(f_g) * c_ref + jax.nn.sigmoid(i_g) * jnp.tanh(g_g)
        h_ref = jax.nn.sigmoid(o_g) * jnp.tanh(c_ref)
    logits_ref = h_ref @ tracker.w_t_t + tracker.b_t

    got_h = tracker.state[:batch, :H]
    got_c = tracker.state[:batch, H:2 * H]
    tol = dict(atol=2e-2, rtol=2e-2)
    assert jnp.allclose(got_h, h_ref, **tol), "h mismatch vs reference"
    assert jnp.allclose(got_c, c_ref, **tol), "c mismatch vs reference"
    assert jnp.allclose(logits, logits_ref, **tol), "logits mismatch vs reference"
    assert jnp.allclose(tracker.state[:, 2 * H:], 0.0, atol=1e-6), \
        "packed tail not zero"

    print("KERNEL_OK")
</pallas_src>

<mosaic_0001>
module attributes {stable_mosaic.version = 11 : i64} {
  func.func @_tracker_step_kernel(%arg0: memref<8x96xbf16, #tpu.memory_space<vmem>>, %arg1: memref<8x128xf32, #tpu.memory_space<vmem>>, %arg2: memref<96x128xbf16, #tpu.memory_space<vmem>>, %arg3: memref<128x128xbf16, #tpu.memory_space<vmem>>, %arg4: memref<1x128xf32, #tpu.memory_space<vmem>>, %arg5: memref<1x128xf32, #tpu.memory_space<vmem>>, %arg6: memref<1x128xf32, #tpu.memory_space<vmem>>, %arg7: memref<8x128xf32, #tpu.memory_space<vmem>>) attributes {dimension_semantics = [], scalar_prefetch = 0 : i64, scratch_operands = 0 : i64, tpu.core_type = #tpu.core_type<tc>} {
    %c0 = arith.constant 0 : index
    %c0_0 = arith.constant 0 : index
    %0 = vector.load %arg0[%c0, %c0_0] : memref<8x96xbf16, #tpu.memory_space<vmem>>, vector<8x96xbf16>
    %c0_1 = arith.constant 0 : index
    %c0_2 = arith.constant 0 : index
    %1 = vector.load %arg1[%c0_1, %c0_2] : memref<8x128xf32, #tpu.memory_space<vmem>>, vector<8x128xf32>
    %c0_3 = arith.constant 0 : index
    %c0_4 = arith.constant 0 : index
    %2 = vector.load %arg2[%c0_3, %c0_4] : memref<96x128xbf16, #tpu.memory_space<vmem>>, vector<96x128xbf16>
    %c0_5 = arith.constant 0 : index
    %c0_6 = arith.constant 0 : index
    %3 = vector.load %arg3[%c0_5, %c0_6] : memref<128x128xbf16, #tpu.memory_space<vmem>>, vector<128x128xbf16>
    %c0_7 = arith.constant 0 : index
    %c0_8 = arith.constant 0 : index
    %4 = vector.load %arg4[%c0_7, %c0_8] : memref<1x128xf32, #tpu.memory_space<vmem>>, vector<1x128xf32>
    %c0_9 = arith.constant 0 : index
    %c0_10 = arith.constant 0 : index
    %5 = vector.load %arg5[%c0_9, %c0_10] : memref<1x128xf32, #tpu.memory_space<vmem>>, vector<1x128xf32>
    %c0_11 = arith.constant 0 : index
    %c0_12 = arith.constant 0 : index
    %6 = vector.load %arg6[%c0_11, %c0_12] : memref<1x128xf32, #tpu.memory_space<vmem>>, vector<1x128xf32>
    %cst = arith.constant dense<0.000000e+00> : vector<8x128xf32>
    %7 = tpu.matmul %0, %2, %cst {dimension_numbers = #tpu.dot_dimension_numbers<[1], [0], [0], [1], [0, 0, 1, 1], [], []>} : vector<8x96xbf16>, vector<96x128xbf16>, vector<8x128xf32> -> vector<8x128xf32>
    %8 = arith.truncf %1 : vector<8x128xf32> to vector<8x128xbf16>
    %cst_13 = arith.constant dense<0.000000e+00> : vector<8x128xf32>
    %9 = tpu.matmul %8, %3, %cst_13 {dimension_numbers = #tpu.dot_dimension_numbers<[1], [0], [0], [1], [0, 0, 1, 1], [], []>} : vector<8x128xbf16>, vector<128x128xbf16>, vector<8x128xf32> -> vector<8x128xf32>
    %10 = arith.addf %7, %9 : vector<8x128xf32>
    %11 = vector.broadcast %4 : vector<1x128xf32> to vector<8x128xf32>
    %12 = arith.addf %10, %11 : vector<8x128xf32>
    %13 = arith.negf %12 : vector<8x128xf32>
    %14 = math.exp %13 : vector<8x128xf32>
    %cst_14 = arith.constant 1.000000e+00 : f32
    %15 = vector.broadcast %cst_14 : f32 to vector<8x128xf32>
    %16 = arith.addf %15, %14 : vector<8x128xf32>
    %17 = arith.divf %15, %16 : vector<8x128xf32>
    %c32_i32 = arith.constant 32 : i32
    %18 = tpu.dynamic_rotate %17 by %c32_i32 dim 1 : vector<8x128xf32>, i32 -> vector<8x128xf32>
    %c96_i32 = arith.constant 96 : i32
    %19 = tpu.dynamic_rotate %17 by %c96_i32 dim 1 : vector<8x128xf32>, i32 -> vector<8x128xf32>
    %20 = arith.mulf %17, %1 : vector<8x128xf32>
    %cst_15 = arith.constant 2.000000e+00 : f32
    %21 = vector.broadcast %cst_15 : f32 to vector<8x128xf32>
    %22 = arith.mulf %21, %19 : vector<8x128xf32>
    %cst_16 = arith.constant 1.000000e+00 : f32
    %23 = vector.broadcast %cst_16 : f32 to vector<8x128xf32>
    %24 = arith.subf %22, %23 : vector<8x128xf32>
    %25 = arith.mulf %18, %24 : vector<8x128xf32>
    %26 = arith.addf %20, %25 : vector<8x128xf32>
    %c96_i32_17 = arith.constant 96 : i32
    %27 = tpu.dynamic_rotate %26 by %c96_i32_17 dim 1 : vector<8x128xf32>, i32 -> vector<8x128xf32>
    %28 = math.tanh %27 : vector<8x128xf32>
    %29 = arith.mulf %18, %28 : vector<8x128xf32>
    %30 = vector.broadcast %5 : vector<1x128xf32> to vector<8x128xf32>
    %31 = arith.mulf %30, %29 : vector<8x128xf32>
    %32 = vector.broadcast %6 : vector<1x128xf32> to vector<8x128xf32>
    %33 = arith.mulf %32, %26 : vector<8x128xf32>
    %34 = arith.addf %31, %33 : vector<8x128xf32>
    %c0_18 = arith.constant 0 : index
    %c0_19 = arith.constant 0 : index
    %35 = vector.load %arg7[%c0_18, %c0_19] : memref<8x128xf32, #tpu.memory_space<vmem>>, vector<8x128xf32>
    tpu.vector_store %arg7[%c0_18, %c0_19], %34 {strides = array<i32>} : memref<8x128xf32, #tpu.memory_space<vmem>>, vector<8x128xf32>,
    return
  }
}

</mosaic_0001>

<llo_original>
// kernel: tracker_step_predict.1
$region0: #{tracker_step_predict.1}
  #allocation0 [shape = 'u32[]', space=smem, size = 0x4, offset = 0x4, fixed_abs, tag = 'smem constant byte address 0x4 - core index']
  #allocation1 [shape = 'u32[72,128]{1,0:T(1,128)}', space=vmem, size = 0x9000, scoped, tag = 'internal scratch']
  %s0 = inlined_call_operand.vmem [shape: bf16[8,96], index: 0, kind: input, shape index: {}]
  %s1 = inlined_call_operand.vmem [shape: f32[8,128], index: 1, kind: input, shape index: {}, may-alias: {1,7}]
  %s2 = inlined_call_operand.hbm [shape: bf16[96,128], index: 2, kind: input, shape index: {}]
  %s3 = inlined_call_operand.hbm [shape: bf16[128,128], index: 3, kind: input, shape index: {}]
  %s4 = inlined_call_operand.vmem [shape: f32[1,128], index: 4, kind: input, shape index: {}]
  %s5 = inlined_call_operand.vmem [shape: f32[1,128], index: 5, kind: input, shape index: {}]
  %s6 = inlined_call_operand.vmem [shape: f32[1,128], index: 6, kind: input, shape index: {}]
  %s7 = inlined_call_operand.vmem [shape: f32[8,128], index: 7, kind: output, shape index: {}, may-alias: {1,7}]
  %s8 = sld [smem:[#allocation0]]
  $region46: #{tracker_step_predict.1} parent=0
    _
  %s10 = ssub.s32 1, %s8
  %s11 = scalar_select 0, %s10, %s8
  $region1: #{tracker_step_predict.1} parent=0
    #allocation2 [shape = 'u8[24576]{0}', space=vmem, size = 0x6000, scoped, tag = 'input window, operand 2, single buffered']
    #allocation3 [shape = 's32[1]{0}', space=sflag, size = 0x4, scoped, tag = 'scoped memory for tracker_step_predict.1']
    #allocation4 [shape = 'u8[32768]{0}', space=vmem, size = 0x8000, scoped, tag = 'input window, operand 3, single buffered']
    #allocation5 [shape = 's32[1]{0}', space=sflag, size = 0x4, scoped, tag = 'scoped memory for tracker_step_predict.1']
    %12 = vsyncpa [#allocation3], 0
    %13 = vsyncpa [#allocation5], 0
    // Predicated region
    $region2: #{tracker_step_predict.1} parent=1 // pred_check
      _
    $region3: #{tracker_step_predict.1} parent=1 // pred_check_branch
      %15 = sbr.rel (0) target = $region5
    $region4: #{tracker_step_predict.1} parent=1 // pred_region
      _
    $region5: #{tracker_step_predict.1} parent=1 // pred_fallthru
      _
    // Predicated region
    $region6: #{tracker_step_predict.1} parent=1 // pred_check
      _
    $region7: #{tracker_step_predict.1} parent=1 // pred_check_branch
      %17 = sbr.rel (0) target = $region9
    $region8: #{tracker_step_predict.1} parent=1 // pred_region
      _
    $region9: #{tracker_step_predict.1} parent=1 // pred_fallthru
      _
    // Predicated region
    $region10: #{tracker_step_predict.1} parent=1 // pred_check
      _
    $region11: #{tracker_step_predict.1} parent=1 // pred_check_branch
      %19 = sbr.rel (0) target = $region13
    $region12: #{tracker_step_predict.1} parent=1 // pred_region
      %21 = vsyncadd [#allocation3], 0
      %s22 = sshll.u32 %s2, 4
      %s23 = int_to_ptr.hbm [resolvable:$true] %s22
      %s24 = sshll.u32 [#allocation2], 4
      %s25 = int_to_ptr.vmem [resolvable:$true] %s24
      %30 = dma.hbm_to_vmem [thread:$0]  %s23, 768, %s25, [#allocation3], 64, 64, 4
    $region13: #{tracker_step_predict.1} parent=1 // pred_fallthru
      _
    // Predicated region
    $region14: #{tracker_step_predict.1} parent=1 // pred_check
      _
    $region15: #{tracker_step_predict.1} parent=1 // pred_check_branch
      %32 = sbr.rel (0) target = $region17
    $region16: #{tracker_step_predict.1} parent=1 // pred_region
      %34 = vsyncadd [#allocation5], 0
      %s35 = sshll.u32 %s3, 4
      %s36 = int_to_ptr.hbm [resolvable:$true] %s35
      %s37 = sshll.u32 [#allocation4], 4
      %s38 = int_to_ptr.vmem [resolvable:$true] %s37
      %43 = dma.hbm_to_vmem [thread:$0]  %s36, 1024, %s38, [#allocation5], 64, 64, 4
    $region17: #{tracker_step_predict.1} parent=1 // pred_fallthru
      _
    // Predicated region
    $region18: #{tracker_step_predict.1} parent=1 // pred_check
      _
    $region19: #{tracker_step_predict.1} parent=1 // pred_check_branch
      %45 = sbr.rel (0) target = $region21
    $region20: #{tracker_step_predict.1} parent=1 // pred_region
      _
    $region21: #{tracker_step_predict.1} parent=1 // pred_fallthru
      _
    // Predicated region
    $region22: #{tracker_step_predict.1} parent=1 // pred_check
      _
    $region23: #{tracker_step_predict.1} parent=1 // pred_check_branch
      %47 = sbr.rel (0) target = $region25
    $region24: #{tracker_step_predict.1} parent=1 // pred_region
      _
    $region25: #{tracker_step_predict.1} parent=1 // pred_fallthru
      _
    // Predicated region
    $region26: #{tracker_step_predict.1} parent=1 // pred_check
      _
    $region27: #{tracker_step_predict.1} parent=1 // pred_check_branch
      %49 = sbr.rel (0) target = $region29
    $region28: #{tracker_step_predict.1} parent=1 // pred_region
      _
    $region29: #{tracker_step_predict.1} parent=1 // pred_fallthru
      _
    // Predicated region
    $region30: #{tracker_step_predict.1} parent=1 // pred_check
      _
    $region31: #{tracker_step_predict.1} parent=1 // pred_check_branch
      %51 = sbr.rel (0) target = $region33
    $region32: #{tracker_step_predict.1} parent=1 // pred_region
      %53 = dma.done [#allocation3], 768
    $region33: #{tracker_step_predict.1} parent=1 // pred_fallthru
      _
    // Predicated region
    $region34: #{tracker_step_predict.1} parent=1 // pred_check
      _
    $region35: #{tracker_step_predict.1} parent=1 // pred_check_branch
      %55 = sbr.rel (0) target = $region37
    $region36: #{tracker_step_predict.1} parent=1 // pred_region
      %57 = dma.done [#allocation5], 1024
    $region37: #{tracker_step_predict.1} parent=1 // pred_fallthru
      _
    %v59 = vld [vmem:[%s0] sm:$0xf]
    %v60 = vld [vmem:[%s1] sm:$0xff]
    %v61 = vld [vmem:[#allocation2] sm:$0xf]
    %v62 = vld [vmem:[#allocation2 + $0x4] sm:$0xf]
    %v63 = vld [vmem:[#allocation2 + $0x8] sm:$0xf]
    %v64 = vld [vmem:[#allocation2 + $0xc] sm:$0xf]
    %v65 = vld [vmem:[#allocation2 + $0x10] sm:$0xf]
    %v66 = vld [vmem:[#allocation2 + $0x14] sm:$0xf]
    %v67 = vld [vmem:[#allocation2 + $0x18] sm:$0xf]
    %v68 = vld [vmem:[#allocation2 + $0x1c] sm:$0xf]
    %v69 = vld [vmem:[#allocation2 + $0x20] sm:$0xf]
    %v70 = vld [vmem:[#allocation2 + $0x24] sm:$0xf]
    %v71 = vld [vmem:[#allocation2 + $0x28] sm:$0xf]
    %v72 = vld [vmem:[#allocation2 + $0x2c] sm:$0xf]
    %v73 = vld [vmem:[#allocation4] sm:$0xf]
    %v74 = vld [vmem:[#allocation4 + $0x4] sm:$0xf]
    %v75 = vld [vmem:[#allocation4 + $0x8] sm:$0xf]
    %v76 = vld [vmem:[#allocation4 + $0xc] sm:$0xf]
    %v77 = vld [vmem:[#allocation4 + $0x10] sm:$0xf]
    %v78 = vld [vmem:[#allocation4 + $0x14] sm:$0xf]
    %v79 = vld [vmem:[#allocation4 + $0x18] sm:$0xf]
    %v80 = vld [vmem:[#allocation4 + $0x1c] sm:$0xf]
    %v81 = vld [vmem:[#allocation4 + $0x20] sm:$0xf]
    %v82 = vld [vmem:[#allocation4 + $0x24] sm:$0xf]
    %v83 = vld [vmem:[#allocation4 + $0x28] sm:$0xf]
    %v84 = vld [vmem:[#allocation4 + $0x2c] sm:$0xf]
    %v85 = vld [vmem:[#allocation4 + $0x30] sm:$0xf]
    %v86 = vld [vmem:[#allocation4 + $0x34] sm:$0xf]
    %v87 = vld [vmem:[#allocation4 + $0x38] sm:$0xf]
    %v88 = vld [vmem:[#allocation4 + $0x3c] sm:$0xf]
    %v89 = vld [vmem:[%s4] sm:$0x1]
    %v90 = vld [vmem:[%s5] sm:$0x1]
    %v91 = vld [vmem:[%s6] sm:$0x1]
    %v92 = vpack.c.bf16 %v60, %v60
    %v109 = vunpack.c.l.b16 %v73
    %v110 = vunpack.c.l.b16 %v74
    %v111 = vunpack.c.l.b16 %v75
    %v112 = vunpack.c.l.b16 %v76
    %v113 = vunpack.c.l.b16 %v77
    %v114 = vunpack.c.l.b16 %v78
    %v115 = vunpack.c.l.b16 %v79
    %v116 = vunpack.c.l.b16 %v80
    %v117 = vunpack.c.l.b16 %v81
    %v118 = vunpack.c.l.b16 %v82
    %v119 = vunpack.c.l.b16 %v83
    %v120 = vunpack.c.l.b16 %v84
    %v121 = vunpack.c.l.b16 %v85
    %v122 = vunpack.c.l.b16 %v86
    %v123 = vunpack.c.l.b16 %v87
    %v124 = vunpack.c.l.b16 %v88
    %v125 = vpack.c.b16 %v110, %v109
    %v126 = vpack.c.b16 %v112, %v111
    %v127 = vpack.c.b16 %v114, %v113
    %v128 = vpack.c.b16 %v116, %v115
    %v129 = vpack.c.b16 %v118, %v117
    %v130 = vpack.c.b16 %v120, %v119
    %v131 = vpack.c.b16 %v122, %v121
    %v132 = vpack.c.b16 %v124, %v123
    %141 = vmatpush.bf16.msra.mxu0 %v132
    %142 = vmatpush.bf16.msra.mxu0 %v131
    %143 = vmatpush.bf16.msra.mxu0 %v130
    %144 = vmatpush.bf16.msra.mxu0 %v129
    %145 = vmatpush.bf16.msra.mxu0 %v128
    %146 = vmatpush.bf16.msra.mxu0 %v127
    %147 = vmatpush.bf16.msra.mxu0 %v126
    %148 = vmatpush.bf16.msra.mxu0 %v125
    %149 = vmatmul.bf16.gmra.mxu0 %v92
    %v150 = vpop.f32.mrf.mxu0
    %v151 = vadd.f32 0.0, %v150
    %v152 = vpop.f32.mrf.mxu0
    %153 = vdwg.mxu0
    %v166 = vunpack.c.l.b16 %v61
    %v167 = vunpack.c.l.b16 %v62
    %v168 = vunpack.c.l.b16 %v63
    %v169 = vunpack.c.l.b16 %v64
    %v170 = vunpack.c.l.b16 %v65
    %v171 = vunpack.c.l.b16 %v66
    %v172 = vunpack.c.l.b16 %v67
    %v173 = vunpack.c.l.b16 %v68
    %v174 = vunpack.c.l.b16 %v69
    %v175 = vunpack.c.l.b16 %v70
    %v176 = vunpack.c.l.b16 %v71
    %v177 = vunpack.c.l.b16 %v72
    %v178 = vpack.c.b16 %v167, %v166
    %v179 = vpack.c.b16 %v169, %v168
    %v180 = vpack.c.b16 %v171, %v170
    %v181 = vpack.c.b16 %v173, %v172
    %v182 = vpack.c.b16 %v175, %v174
    %v183 = vpack.c.b16 %v177, %v176
    %vm190 = vcmask 785408
    %v192 = vsel %vm190, %v59, 0
    %194 = vmatpush.bf16.msra.mxu0 0
    %195 = vmatpush.bf16.msra.mxu0 0
    %196 = vmatpush.bf16.msra.mxu0 %v183
    %197 = vmatpush.bf16.msra.mxu0 %v182
    %198 = vmatpush.bf16.msra.mxu0 %v181
    %199 = vmatpush.bf16.msra.mxu0 %v180
    %200 = vmatpush.bf16.msra.mxu0 %v179
    %201 = vmatpush.bf16.msra.mxu0 %v178
    %202 = vmatmul.bf16.gmra.mxu0 %v192
    %v203 = vpop.f32.mrf.mxu0
    %v204 = vadd.f32 %v151, %v203
    %v205 = vpop.f32.mrf.mxu0
    %206 = vdwg.mxu0
    %v208 = vperm.slane %v89, 0
    %v210 = vadd.f32 %v204, %v208
    %v211 = vxor.u32 %v210, 2147483648
    %v212 = vmul.f32 %v211, 1.442695
    %v213 = vpow.pop %v212
    %v214 = vadd.f32 %v213, 1.0
    %v215 = vrcp.pop %v214
    %v216 = vmul.f32 %v214, %v215
    %v217 = vsub.f32 1.0, %v216
    %v218 = vmul.f32 %v215, %v217
    %v219 = vadd.f32 %v215, %v218
    %vm220 = vweird.f32 %v214
    %vm221 = vweird.f32 %v215
    %vm222 = vmor %vm220, %vm221
    %v223 = vsel %vm222, %v215, %v219
    %v224 = vand.u32 2147483647, %v214
    %vm225 = vcmp.eq.f32.partialorder %v224, 8.507059e+37
    %v226 = vand.u32 %v214, 2147483648
    %v227 = vor.u32 1.1754944e-38, %v226
    %v228 = vsel %vm225, %v227, %v223
    %v229 = vmul.f32 1.0, %v228
    %230 = vrot.lane.b32.xlu0 %v229, 32
    %v231 = vpop.permute.xlu0 %230
    %232 = vrot.lane.b32.xlu0 %v229, 96
    %v233 = vpop.permute.xlu0 %232
    %v234 = vmul.f32 %v229, %v60
    %v235 = vmul.f32 %v233, 2.0
    %v236 = vsub.f32 %v235, 1.0
    %v237 = vmul.f32 %v231, %v236
    %v238 = vadd.f32 %v234, %v237
    %239 = vrot.lane.b32.xlu0 %v238, 96
    %v240 = vpop.permute.xlu0 %239
    %v241 = vtanh.pop %v240
    %v242 = vmul.f32 %v231, %v241
    %v244 = vperm.slane %v90, 0
    %v246 = vmul.f32 %v244, %v242
    %v248 = vperm.slane %v91, 0
    %v250 = vmul.f32 %v248, %v238
    %v251 = vadd.f32 %v246, %v250
    %252 = vst [vmem:[%s7] sm:$0xff] %v251
    // Predicated region
    $region38: #{tracker_step_predict.1} parent=1 // pred_check
      _
    $region39: #{tracker_step_predict.1} parent=1 // pred_check_branch
      %254 = sbr.rel (0) target = $region41
    $region40: #{tracker_step_predict.1} parent=1 // pred_region
      _
    $region41: #{tracker_step_predict.1} parent=1 // pred_fallthru
      _
    // Predicated region
    $region42: #{tracker_step_predict.1} parent=1 // pred_check
      _
    $region43: #{tracker_step_predict.1} parent=1 // pred_check_branch
      %256 = sbr.rel (0) target = $region45
    $region44: #{tracker_step_predict.1} parent=1 // pred_region
      _
    $region45: #{tracker_step_predict.1} parent=1 // pred_fallthru
      _
    %257 = vsyncpa [#allocation3], 1
    %258 = vsyncpa [#allocation5], 1

</llo_original>
